<compile_context>
chip_gen: v5e
topology: v5e:2x2
jax: 0.10.0
libtpu: 0.0.40
codegen_flags: <defaults>
</compile_context>

<pallas_src>
import jax
import jax.numpy as jnp
from jax.experimental import pallas as pl
from jax.experimental.pallas import tpu as pltpu

K_IN = 784        # contraction dim (28*28), full-extent in the BlockSpec
N_HID = 128
N_OUT = 10
N_OUT_PAD = 128   # lane-dense padded output width


def mlp_kernel(x_ref, w1_ref, b1_ref, w2_ref, b2_ref, o_ref):
    # x arrives as f32 straight from HBM (no wrapper pad/copy pass);
    # cast to bf16 on-core right before the MXU.
    xb = x_ref[...].astype(jnp.bfloat16)
    h = jnp.dot(xb, w1_ref[...], preferred_element_type=jnp.float32)
    h = jnp.maximum(h + b1_ref[...], 0.0)
    o = jnp.dot(h.astype(jnp.bfloat16), w2_ref[...],
                preferred_element_type=jnp.float32)
    o_ref[...] = (o + b2_ref[...]).astype(o_ref.dtype)


def prepare_params(w1, b1, w2, b2):
    """One-time weight prep: bf16 casts + lane-dense padding of fc2 (10->128).

    w1: (784, 128), b1: (1, 128) or (128,), w2: (128, 10), b2: (1, 10) or (10,)
    """
    w1_p = w1.astype(jnp.bfloat16)                                   # (784, 128)
    b1_p = jnp.asarray(b1, jnp.float32).reshape(1, N_HID)            # (1, 128)
    w2_p = jnp.zeros((N_HID, N_OUT_PAD), jnp.bfloat16)
    w2_p = w2_p.at[:, :N_OUT].set(w2.astype(jnp.bfloat16))           # (128, 128)
    b2_p = jnp.zeros((1, N_OUT_PAD), jnp.float32)
    b2_p = b2_p.at[:, :N_OUT].set(
        jnp.asarray(b2, jnp.float32).reshape(1, N_OUT))              # (1, 128)
    return w1_p, b1_p, w2_p, b2_p


def _pick_tb(batch, tb):
    """Batch-tile size: multiple of 8, >=2 tiles when possible (v7x 2 TCs)."""
    if batch <= 8:
        return 8
    half = (((batch + 1) // 2) + 7) // 8 * 8   # ceil(B/2) rounded up to 8
    return max(8, min(tb, half))


def simple_model_forward(x, params, tb=1024):
    """x: anything that flattens to (B, 784), f32. Returns (B, 10) f32 logits."""
    w1_p, b1_p, w2_p, b2_p = params
    xf = x.reshape(-1, K_IN)
    if xf.dtype != jnp.float32:
        xf = xf.astype(jnp.float32)
    B = xf.shape[0]
    TB = _pick_tb(B, tb)
    grid = (pl.cdiv(B, TB),)   # ragged last block handled by Pallas masking

    cost = pl.CostEstimate(
        flops=2 * B * (K_IN * N_HID + N_HID * N_OUT_PAD),
        transcendentals=0,
        bytes_accessed=(xf.size * 4 + w1_p.size * 2 + w2_p.size * 2
                        + b1_p.size * 4 + b2_p.size * 4
                        + B * N_OUT_PAD * 4),
    )

    out = pl.pallas_call(
        mlp_kernel,
        out_shape=jax.ShapeDtypeStruct((B, N_OUT_PAD), jnp.float32),
        grid_spec=pltpu.PrefetchScalarGridSpec(
            num_scalar_prefetch=0,
            grid=grid,
            in_specs=[
                pl.BlockSpec((TB, K_IN), lambda i: (i, 0)),          # x tile (f32)
                pl.BlockSpec((K_IN, N_HID), lambda i: (0, 0)),       # w1 (resident)
                pl.BlockSpec((1, N_HID), lambda i: (0, 0)),          # b1
                pl.BlockSpec((N_HID, N_OUT_PAD), lambda i: (0, 0)),  # w2 (padded)
                pl.BlockSpec((1, N_OUT_PAD), lambda i: (0, 0)),      # b2 (padded)
            ],
            out_specs=pl.BlockSpec((TB, N_OUT_PAD), lambda i: (i, 0)),
        ),
        compiler_params=pltpu.CompilerParams(
            dimension_semantics=("parallel",),   # batch tiles across TCs (v7x)
        ),
        cost_estimate=cost,
    )(xf, w1_p, b1_p, w2_p, b2_p)

    # Lane-dense (., 128) store inside the kernel; logical 10 logits here.
    return out[:, :N_OUT]


def init_params():
    """Deterministic init matching PyTorch Linear shapes (stored transposed)."""
    k = jax.random.PRNGKey(0)
    k1, k2, k3, k4 = jax.random.split(k, 4)
    bound1 = 1.0 / jnp.sqrt(784.0)
    bound2 = 1.0 / jnp.sqrt(128.0)
    w1 = jax.random.uniform(k1, (784, 128), jnp.float32, -bound1, bound1)
    b1 = jax.random.uniform(k2, (1, 128), jnp.float32, -bound1, bound1)
    w2 = jax.random.uniform(k3, (128, 10), jnp.float32, -bound2, bound2)
    b2 = jax.random.uniform(k4, (1, 10), jnp.float32, -bound2, bound2)
    return w1, b1, w2, b2


if __name__ == "__main__":
    key = jax.random.PRNGKey(0)
    x = jax.random.normal(key, (2, 1, 28, 28), jnp.float32)   # NCHW -> (2, 784)
    w1, b1, w2, b2 = init_params()
    params = prepare_params(w1, b1, w2, b2)   # one-time weight prep (hoisted)

    fwd = jax.jit(simple_model_forward)
    out = fwd(x, params)
    jax.block_until_ready(out)

    # correctness check against plain-JAX f32 reference
    # (bf16 matmul operands => loosened tolerance)
    ref = jnp.maximum(x.reshape(-1, 784) @ w1 + b1, 0.0) @ w2 + b2
    assert out.shape == (2, 10)
    assert jnp.allclose(out, ref, atol=3e-2, rtol=3e-2)
    print("KERNEL_OK")
</pallas_src>

<mosaic_0001>
module attributes {stable_mosaic.version = 11 : i64} {
  func.func @mlp_kernel(%arg0: i32, %arg1: memref<8x784xf32, #tpu.memory_space<vmem>>, %arg2: memref<784x128xbf16, #tpu.memory_space<vmem>>, %arg3: memref<1x128xf32, #tpu.memory_space<vmem>>, %arg4: memref<128x128xbf16, #tpu.memory_space<vmem>>, %arg5: memref<1x128xf32, #tpu.memory_space<vmem>>, %arg6: memref<8x128xf32, #tpu.memory_space<vmem>>) attributes {dimension_semantics = [#tpu.dimension_semantics<parallel>], iteration_bounds = array<i64: 1>, scalar_prefetch = 0 : i64, scratch_operands = 0 : i64, tpu.core_type = #tpu.core_type<tc>, window_params = [{transform_indices = @transform_0, window_bounds = array<i64: 8, 784>}, {pipeline_mode = #tpu.pipeline_mode<synchronous>, transform_indices = @transform_1, window_bounds = array<i64: 784, 128>}, {pipeline_mode = #tpu.pipeline_mode<synchronous>, transform_indices = @transform_2, window_bounds = array<i64: 1, 128>}, {pipeline_mode = #tpu.pipeline_mode<synchronous>, transform_indices = @transform_3, window_bounds = array<i64: 128, 128>}, {pipeline_mode = #tpu.pipeline_mode<synchronous>, transform_indices = @transform_4, window_bounds = array<i64: 1, 128>}, {transform_indices = @transform_5, window_bounds = array<i64: 8, 128>}]} {
    %c0 = arith.constant 0 : index
    %c0_0 = arith.constant 0 : index
    %0 = vector.load %arg1[%c0, %c0_0] : memref<8x784xf32, #tpu.memory_space<vmem>>, vector<8x784xf32>
    %1 = arith.truncf %0 : vector<8x784xf32> to vector<8x784xbf16>
    %c0_1 = arith.constant 0 : index
    %c0_2 = arith.constant 0 : index
    %2 = vector.load %arg2[%c0_1, %c0_2] : memref<784x128xbf16, #tpu.memory_space<vmem>>, vector<784x128xbf16>
    %cst = arith.constant dense<0.000000e+00> : vector<8x128xf32>
    %3 = tpu.matmul %1, %2, %cst {dimension_numbers = #tpu.dot_dimension_numbers<[1], [0], [0], [1], [0, 0, 1, 1], [], []>} : vector<8x784xbf16>, vector<784x128xbf16>, vector<8x128xf32> -> vector<8x128xf32>
    %c0_3 = arith.constant 0 : index
    %c0_4 = arith.constant 0 : index
    %4 = vector.load %arg3[%c0_3, %c0_4] : memref<1x128xf32, #tpu.memory_space<vmem>>, vector<1x128xf32>
    %5 = vector.broadcast %4 : vector<1x128xf32> to vector<8x128xf32>
    %6 = arith.addf %3, %5 : vector<8x128xf32>
    %cst_5 = arith.constant 0.000000e+00 : f32
    %7 = vector.broadcast %cst_5 : f32 to vector<8x128xf32>
    %8 = arith.maximumf %6, %7 : vector<8x128xf32>
    %9 = arith.truncf %8 : vector<8x128xf32> to vector<8x128xbf16>
    %c0_6 = arith.constant 0 : index
    %c0_7 = arith.constant 0 : index
    %10 = vector.load %arg4[%c0_6, %c0_7] : memref<128x128xbf16, #tpu.memory_space<vmem>>, vector<128x128xbf16>
    %cst_8 = arith.constant dense<0.000000e+00> : vector<8x128xf32>
    %11 = tpu.matmul %9, %10, %cst_8 {dimension_numbers = #tpu.dot_dimension_numbers<[1], [0], [0], [1], [0, 0, 1, 1], [], []>} : vector<8x128xbf16>, vector<128x128xbf16>, vector<8x128xf32> -> vector<8x128xf32>
    %c0_9 = arith.constant 0 : index
    %c0_10 = arith.constant 0 : index
    %12 = vector.load %arg5[%c0_9, %c0_10] : memref<1x128xf32, #tpu.memory_space<vmem>>, vector<1x128xf32>
    %13 = vector.broadcast %12 : vector<1x128xf32> to vector<8x128xf32>
    %14 = arith.addf %11, %13 : vector<8x128xf32>
    %c0_11 = arith.constant 0 : index
    %c0_12 = arith.constant 0 : index
    %15 = vector.load %arg6[%c0_11, %c0_12] : memref<8x128xf32, #tpu.memory_space<vmem>>, vector<8x128xf32>
    tpu.vector_store %arg6[%c0_11, %c0_12], %14 {strides = array<i32>} : memref<8x128xf32, #tpu.memory_space<vmem>>, vector<8x128xf32>,
    return
  }
  func.func @transform_0(%arg0: i32) -> (i32, i32) {
    %c0_i32 = arith.constant 0 : i32
    %c0_i32_0 = arith.constant 0 : i32
    return %arg0, %c0_i32 : i32, i32
  }
  func.func @transform_1(%arg0: i32) -> (i32, i32) {
    %c0_i32 = arith.constant 0 : i32
    %c0_i32_0 = arith.constant 0 : i32
    %c0_i32_1 = arith.constant 0 : i32
    return %c0_i32, %c0_i32_0 : i32, i32
  }
  func.func @transform_2(%arg0: i32) -> (i32, i32) {
    %c0_i32 = arith.constant 0 : i32
    %c0_i32_0 = arith.constant 0 : i32
    %c0_i32_1 = arith.constant 0 : i32
    return %c0_i32, %c0_i32_0 : i32, i32
  }
  func.func @transform_3(%arg0: i32) -> (i32, i32) {
    %c0_i32 = arith.constant 0 : i32
    %c0_i32_0 = arith.constant 0 : i32
    %c0_i32_1 = arith.constant 0 : i32
    return %c0_i32, %c0_i32_0 : i32, i32
  }
  func.func @transform_4(%arg0: i32) -> (i32, i32) {
    %c0_i32 = arith.constant 0 : i32
    %c0_i32_0 = arith.constant 0 : i32
    %c0_i32_1 = arith.constant 0 : i32
    return %c0_i32, %c0_i32_0 : i32, i32
  }
  func.func @transform_5(%arg0: i32) -> (i32, i32) {
    %c0_i32 = arith.constant 0 : i32
    %c0_i32_0 = arith.constant 0 : i32
    return %arg0, %c0_i32 : i32, i32
  }
}

</mosaic_0001>

<llo_original>
// kernel: simple_model_forward.1
$region0: #{simple_model_forward.1}
  #allocation0 [shape = 'u32[]', space=smem, size = 0x4, offset = 0x4, fixed_abs, tag = 'smem constant byte address 0x4 - core index']
  #allocation1 [shape = 'u32[72,128]{1,0:T(1,128)}', space=vmem, size = 0x9000, scoped, tag = 'internal scratch']
  %s0 = inlined_call_operand.vmem [shape: f32[2,784], index: 0, kind: input, shape index: {}]
  %s1 = inlined_call_operand.hbm [shape: bf16[784,128], index: 1, kind: input, shape index: {}]
  %s2 = inlined_call_operand.vmem [shape: f32[1,128], index: 2, kind: input, shape index: {}]
  %s3 = inlined_call_operand.vmem [shape: bf16[128,128], index: 3, kind: input, shape index: {}]
  %s4 = inlined_call_operand.vmem [shape: f32[1,128], index: 4, kind: input, shape index: {}]
  %s5 = inlined_call_operand.hbm [shape: f32[2,128], index: 5, kind: output, shape index: {}]
  %s6 = sld [smem:[#allocation0]]
  $region34: #{simple_model_forward.1} parent=0
    _
  %s8 = ssub.s32 1, %s6
  %s9 = scalar_select 0, %s8, %s6
  $region1: #{simple_model_forward.1} parent=0
    #allocation2 [shape = 'u8[200704]{0}', space=vmem, size = 0x31000, scoped, tag = 'input window, operand 1, single buffered']
    #allocation3 [shape = 's32[1]{0}', space=sflag, size = 0x4, scoped, tag = 'scoped memory for simple_model_forward.1']
    #allocation4 [shape = 's32[1]{0}', space=sflag, size = 0x4, scoped, tag = 'scoped memory for simple_model_forward.1']
    #allocation5 [shape = 'u8[4096]{0}', space=vmem, size = 0x1000, scoped, tag = 'output window, operand 0, single buffered']
    %10 = vsyncpa [#allocation3], 0
    %11 = vsyncpa [#allocation4], 0
    // Predicated region
    $region2: #{simple_model_forward.1} parent=1 // pred_check
      _
    $region3: #{simple_model_forward.1} parent=1 // pred_check_branch
      %13 = sbr.rel (0) target = $region5
    $region4: #{simple_model_forward.1} parent=1 // pred_region
      _
    $region5: #{simple_model_forward.1} parent=1 // pred_fallthru
      _
    // Predicated region
    $region6: #{simple_model_forward.1} parent=1 // pred_check
      _
    $region7: #{simple_model_forward.1} parent=1 // pred_check_branch
      %15 = sbr.rel (0) target = $region9
    $region8: #{simple_model_forward.1} parent=1 // pred_region
      %17 = vsyncadd [#allocation3], 0
      %s18 = sshll.u32 %s1, 4
      %s19 = int_to_ptr.hbm [resolvable:$true] %s18
      %s20 = sshll.u32 [#allocation2], 4
      %s21 = int_to_ptr.vmem [resolvable:$true] %s20
      %26 = dma.hbm_to_vmem [thread:$0]  %s19, 6272, %s21, [#allocation3], 64, 64, 4
    $region9: #{simple_model_forward.1} parent=1 // pred_fallthru
      _
    // Predicated region
    $region10: #{simple_model_forward.1} parent=1 // pred_check
      _
    $region11: #{simple_model_forward.1} parent=1 // pred_check_branch
      %28 = sbr.rel (0) target = $region13
    $region12: #{simple_model_forward.1} parent=1 // pred_region
      _
    $region13: #{simple_model_forward.1} parent=1 // pred_fallthru
      _
    // Predicated region
    $region14: #{simple_model_forward.1} parent=1 // pred_check
      _
    $region15: #{simple_model_forward.1} parent=1 // pred_check_branch
      %30 = sbr.rel (0) target = $region17
    $region16: #{simple_model_forward.1} parent=1 // pred_region
      _
    $region17: #{simple_model_forward.1} parent=1 // pred_fallthru
      _
    // Predicated region
    $region18: #{simple_model_forward.1} parent=1 // pred_check
      _
    $region19: #{simple_model_forward.1} parent=1 // pred_check_branch
      %32 = sbr.rel (0) target = $region21
    $region20: #{simple_model_forward.1} parent=1 // pred_region
      _
    $region21: #{simple_model_forward.1} parent=1 // pred_fallthru
      _
    // Predicated region
    $region22: #{simple_model_forward.1} parent=1 // pred_check
      _
    $region23: #{simple_model_forward.1} parent=1 // pred_check_branch
      %34 = sbr.rel (0) target = $region25
    $region24: #{simple_model_forward.1} parent=1 // pred_region
      %36 = dma.done [#allocation3], 6272
    $region25: #{simple_model_forward.1} parent=1 // pred_fallthru
      _
    %v38 = vld [vmem:[%s0] sm:$0xff]
    %v39 = vld [vmem:[%s0 + $0x8] sm:$0x3f]
    %v40 = vld [vmem:[%s0 + $0xe] sm:$0xff]
    %v41 = vld [vmem:[%s0 + $0x16] sm:$0x3f]
    %v42 = vld [vmem:[%s0 + $0x1c] sm:$0xff]
    %v43 = vld [vmem:[%s0 + $0x24] sm:$0x3f]
    %v44 = vld [vmem:[%s0 + $0x2a] sm:$0xff]
    %v45 = vld [vmem:[%s0 + $0x32] sm:$0x3f]
    %54 = vst [vmem:[#allocation1] ss:$4 sm:$0xff] %v38
    %s55 = scalar_lea.vmem [#allocation1], 1
    %56 = vst [vmem:[%s55] ss:$4 sm:$0xff] %v40
    %s57 = scalar_lea.vmem [#allocation1], 2
    %58 = vst [vmem:[%s57] ss:$4 sm:$0xff] %v42
    %s59 = scalar_lea.vmem [#allocation1], 3
    %60 = vst [vmem:[%s59] ss:$4 sm:$0xff] %v44
    %s61 = scalar_lea.vmem [#allocation1], 32
    %62 = vst [vmem:[%s61] ss:$4 sm:$0xff] %v39
    %s63 = scalar_lea.vmem [#allocation1], 33
    %64 = vst [vmem:[%s63] ss:$4 sm:$0xff] %v41
    %s65 = scalar_lea.vmem [#allocation1], 34
    %66 = vst [vmem:[%s65] ss:$4 sm:$0xff] %v43
    %s67 = scalar_lea.vmem [#allocation1], 35
    %68 = vst [vmem:[%s67] ss:$4 sm:$0xff] %v45
    %v69 = vld.sshfl [vmem:[#allocation1] sm:$0xff pattern:$0x73625140]
    %v70 = vld.sshfl [vmem:[#allocation1 + $0x8] sm:$0xff pattern:$0x73625140]
    %v71 = vld.sshfl [vmem:[#allocation1 + $0x10] sm:$0xff pattern:$0x73625140]
    %v72 = vld.sshfl [vmem:[#allocation1 + $0x18] sm:$0xff pattern:$0x73625140]
    %v73 = vld.sshfl [vmem:[#allocation1 + $0x20] sm:$0xff pattern:$0x73625140]
    %v74 = vld.sshfl [vmem:[#allocation1 + $0x28] sm:$0xff pattern:$0x73625140]
    %v75 = vld.sshfl [vmem:[#allocation1 + $0x30] sm:$0xff pattern:$0x73625140]
    %v83 = vpack.c.bf16 %v69, %v69
    %v84 = vpack.c.bf16 %v70, %v70
    %v85 = vpack.c.bf16 %v71, %v71
    %v86 = vpack.c.bf16 %v72, %v72
    %v87 = vpack.c.bf16 %v73, %v73
    %v88 = vpack.c.bf16 %v74, %v74
    %v89 = vpack.c.bf16 %v75, %v75
    %v90 = vld [vmem:[#allocation2] sm:$0xf]
    %v91 = vld [vmem:[#allocation2 + $0x4] sm:$0xf]
    %v92 = vld [vmem:[#allocation2 + $0x8] sm:$0xf]
    %v93 = vld [vmem:[#allocation2 + $0xc] sm:$0xf]
    %v94 = vld [vmem:[#allocation2 + $0x10] sm:$0xf]
    %v95 = vld [vmem:[#allocation2 + $0x14] sm:$0xf]
    %v96 = vld [vmem:[#allocation2 + $0x18] sm:$0xf]
    %v97 = vld [vmem:[#allocation2 + $0x1c] sm:$0xf]
    %v98 = vld [vmem:[#allocation2 + $0x20] sm:$0xf]
    %v99 = vld [vmem:[#allocation2 + $0x24] sm:$0xf]
    %v100 = vld [vmem:[#allocation2 + $0x28] sm:$0xf]
    %v101 = vld [vmem:[#allocation2 + $0x2c] sm:$0xf]
    %v102 = vld [vmem:[#allocation2 + $0x30] sm:$0xf]
    %v103 = vld [vmem:[#allocation2 + $0x34] sm:$0xf]
    %v104 = vld [vmem:[#allocation2 + $0x38] sm:$0xf]
    %v105 = vld [vmem:[#allocation2 + $0x3c] sm:$0xf]
    %v106 = vld [vmem:[#allocation2 + $0x40] sm:$0xf]
    %v107 = vld [vmem:[#allocation2 + $0x44] sm:$0xf]
    %v108 = vld [vmem:[#allocation2 + $0x48] sm:$0xf]
    %v109 = vld [vmem:[#allocation2 + $0x4c] sm:$0xf]
    %v110 = vld [vmem:[#allocation2 + $0x50] sm:$0xf]
    %v111 = vld [vmem:[#allocation2 + $0x54] sm:$0xf]
    %v112 = vld [vmem:[#allocation2 + $0x58] sm:$0xf]
    %v113 = vld [vmem:[#allocation2 + $0x5c] sm:$0xf]
    %v114 = vld [vmem:[#allocation2 + $0x60] sm:$0xf]
    %v115 = vld [vmem:[#allocation2 + $0x64] sm:$0xf]
    %v116 = vld [vmem:[#allocation2 + $0x68] sm:$0xf]
    %v117 = vld [vmem:[#allocation2 + $0x6c] sm:$0xf]
    %v118 = vld [vmem:[#allocation2 + $0x70] sm:$0xf]
    %v119 = vld [vmem:[#allocation2 + $0x74] sm:$0xf]
    %v120 = vld [vmem:[#allocation2 + $0x78] sm:$0xf]
    %v121 = vld [vmem:[#allocation2 + $0x7c] sm:$0xf]
    %v122 = vld [vmem:[#allocation2 + $0x80] sm:$0xf]
    %v123 = vld [vmem:[#allocation2 + $0x84] sm:$0xf]
    %v124 = vld [vmem:[#allocation2 + $0x88] sm:$0xf]
    %v125 = vld [vmem:[#allocation2 + $0x8c] sm:$0xf]
    %v126 = vld [vmem:[#allocation2 + $0x90] sm:$0xf]
    %v127 = vld [vmem:[#allocation2 + $0x94] sm:$0xf]
    %v128 = vld [vmem:[#allocation2 + $0x98] sm:$0xf]
    %v129 = vld [vmem:[#allocation2 + $0x9c] sm:$0xf]
    %v130 = vld [vmem:[#allocation2 + $0xa0] sm:$0xf]
    %v131 = vld [vmem:[#allocation2 + $0xa4] sm:$0xf]
    %v132 = vld [vmem:[#allocation2 + $0xa8] sm:$0xf]
    %v133 = vld [vmem:[#allocation2 + $0xac] sm:$0xf]
    %v134 = vld [vmem:[#allocation2 + $0xb0] sm:$0xf]
    %v135 = vld [vmem:[#allocation2 + $0xb4] sm:$0xf]
    %v136 = vld [vmem:[#allocation2 + $0xb8] sm:$0xf]
    %v137 = vld [vmem:[#allocation2 + $0xbc] sm:$0xf]
    %v138 = vld [vmem:[#allocation2 + $0xc0] sm:$0xf]
    %v139 = vld [vmem:[#allocation2 + $0xc4] sm:$0xf]
    %v140 = vld [vmem:[#allocation2 + $0xc8] sm:$0xf]
    %v141 = vld [vmem:[#allocation2 + $0xcc] sm:$0xf]
    %v142 = vld [vmem:[#allocation2 + $0xd0] sm:$0xf]
    %v143 = vld [vmem:[#allocation2 + $0xd4] sm:$0xf]
    %v144 = vld [vmem:[#allocation2 + $0xd8] sm:$0xf]
    %v145 = vld [vmem:[#allocation2 + $0xdc] sm:$0xf]
    %v146 = vld [vmem:[#allocation2 + $0xe0] sm:$0xf]
    %v147 = vld [vmem:[#allocation2 + $0xe4] sm:$0xf]
    %v148 = vld [vmem:[#allocation2 + $0xe8] sm:$0xf]
    %v149 = vld [vmem:[#allocation2 + $0xec] sm:$0xf]
    %v150 = vld [vmem:[#allocation2 + $0xf0] sm:$0xf]
    %v151 = vld [vmem:[#allocation2 + $0xf4] sm:$0xf]
    %v152 = vld [vmem:[#allocation2 + $0xf8] sm:$0xf]
    %v153 = vld [vmem:[#allocation2 + $0xfc] sm:$0xf]
    %v154 = vld [vmem:[#allocation2 + $0x100] sm:$0xf]
    %v155 = vld [vmem:[#allocation2 + $0x104] sm:$0xf]
    %v156 = vld [vmem:[#allocation2 + $0x108] sm:$0xf]
    %v157 = vld [vmem:[#allocation2 + $0x10c] sm:$0xf]
    %v158 = vld [vmem:[#allocation2 + $0x110] sm:$0xf]
    %v159 = vld [vmem:[#allocation2 + $0x114] sm:$0xf]
    %v160 = vld [vmem:[#allocation2 + $0x118] sm:$0xf]
    %v161 = vld [vmem:[#allocation2 + $0x11c] sm:$0xf]
    %v162 = vld [vmem:[#allocation2 + $0x120] sm:$0xf]
    %v163 = vld [vmem:[#allocation2 + $0x124] sm:$0xf]
    %v164 = vld [vmem:[#allocation2 + $0x128] sm:$0xf]
    %v165 = vld [vmem:[#allocation2 + $0x12c] sm:$0xf]
    %v166 = vld [vmem:[#allocation2 + $0x130] sm:$0xf]
    %v167 = vld [vmem:[#allocation2 + $0x134] sm:$0xf]
    %v168 = vld [vmem:[#allocation2 + $0x138] sm:$0xf]
    %v169 = vld [vmem:[#allocation2 + $0x13c] sm:$0xf]
    %v170 = vld [vmem:[#allocation2 + $0x140] sm:$0xf]
    %v171 = vld [vmem:[#allocation2 + $0x144] sm:$0xf]
    %v172 = vld [vmem:[#allocation2 + $0x148] sm:$0xf]
    %v173 = vld [vmem:[#allocation2 + $0x14c] sm:$0xf]
    %v174 = vld [vmem:[#allocation2 + $0x150] sm:$0xf]
    %v175 = vld [vmem:[#allocation2 + $0x154] sm:$0xf]
    %v176 = vld [vmem:[#allocation2 + $0x158] sm:$0xf]
    %v177 = vld [vmem:[#allocation2 + $0x15c] sm:$0xf]
    %v178 = vld [vmem:[#allocation2 + $0x160] sm:$0xf]
    %v179 = vld [vmem:[#allocation2 + $0x164] sm:$0xf]
    %v180 = vld [vmem:[#allocation2 + $0x168] sm:$0xf]
    %v181 = vld [vmem:[#allocation2 + $0x16c] sm:$0xf]
    %v182 = vld [vmem:[#allocation2 + $0x170] sm:$0xf]
    %v183 = vld [vmem:[#allocation2 + $0x174] sm:$0xf]
    %v184 = vld [vmem:[#allocation2 + $0x178] sm:$0xf]
    %v185 = vld [vmem:[#allocation2 + $0x17c] sm:$0xf]
    %v186 = vld [vmem:[#allocation2 + $0x180] sm:$0xf]
    %v187 = vld [vmem:[#allocation2 + $0x184] sm:$0xf]
    %v188 = vld [vmem:[%s2] sm:$0x1]
    %v190 = vperm.slane %v188, 0
    %v290 = vunpack.c.l.b16 %v90
    %v291 = vunpack.c.l.b16 %v91
    %v292 = vunpack.c.l.b16 %v92
    %v293 = vunpack.c.l.b16 %v93
    %v294 = vunpack.c.l.b16 %v94
    %v295 = vunpack.c.l.b16 %v95
    %v296 = vunpack.c.l.b16 %v96
    %v297 = vunpack.c.l.b16 %v97
    %v298 = vunpack.c.l.b16 %v98
    %v299 = vunpack.c.l.b16 %v99
    %v300 = vunpack.c.l.b16 %v100
    %v301 = vunpack.c.l.b16 %v101
    %v302 = vunpack.c.l.b16 %v102
    %v303 = vunpack.c.l.b16 %v103
    %v304 = vunpack.c.l.b16 %v104
    %v305 = vunpack.c.l.b16 %v105
    %v306 = vunpack.c.l.b16 %v106
    %v307 = vunpack.c.l.b16 %v107
    %v308 = vunpack.c.l.b16 %v108
    %v309 = vunpack.c.l.b16 %v109
    %v310 = vunpack.c.l.b16 %v110
    %v311 = vunpack.c.l.b16 %v111
    %v312 = vunpack.c.l.b16 %v112
    %v313 = vunpack.c.l.b16 %v113
    %v314 = vunpack.c.l.b16 %v114
    %v315 = vunpack.c.l.b16 %v115
    %v316 = vunpack.c.l.b16 %v116
    %v317 = vunpack.c.l.b16 %v117
    %v318 = vunpack.c.l.b16 %v118
    %v319 = vunpack.c.l.b16 %v119
    %v320 = vunpack.c.l.b16 %v120
    %v321 = vunpack.c.l.b16 %v121
    %v322 = vunpack.c.l.b16 %v122
    %v323 = vunpack.c.l.b16 %v123
    %v324 = vunpack.c.l.b16 %v124
    %v325 = vunpack.c.l.b16 %v125
    %v326 = vunpack.c.l.b16 %v126
    %v327 = vunpack.c.l.b16 %v127
    %v328 = vunpack.c.l.b16 %v128
    %v329 = vunpack.c.l.b16 %v129
    %v330 = vunpack.c.l.b16 %v130
    %v331 = vunpack.c.l.b16 %v131
    %v332 = vunpack.c.l.b16 %v132
    %v333 = vunpack.c.l.b16 %v133
    %v334 = vunpack.c.l.b16 %v134
    %v335 = vunpack.c.l.b16 %v135
    %v336 = vunpack.c.l.b16 %v136
    %v337 = vunpack.c.l.b16 %v137
    %v338 = vunpack.c.l.b16 %v138
    %v339 = vunpack.c.l.b16 %v139
    %v340 = vunpack.c.l.b16 %v140
    %v341 = vunpack.c.l.b16 %v141
    %v342 = vunpack.c.l.b16 %v142
    %v343 = vunpack.c.l.b16 %v143
    %v344 = vunpack.c.l.b16 %v144
    %v345 = vunpack.c.l.b16 %v145
    %v346 = vunpack.c.l.b16 %v146
    %v347 = vunpack.c.l.b16 %v147
    %v348 = vunpack.c.l.b16 %v148
    %v349 = vunpack.c.l.b16 %v149
    %v350 = vunpack.c.l.b16 %v150
    %v351 = vunpack.c.l.b16 %v151
    %v352 = vunpack.c.l.b16 %v152
    %v353 = vunpack.c.l.b16 %v153
    %v354 = vunpack.c.l.b16 %v154
    %v355 = vunpack.c.l.b16 %v155
    %v356 = vunpack.c.l.b16 %v156
    %v357 = vunpack.c.l.b16 %v157
    %v358 = vunpack.c.l.b16 %v158
    %v359 = vunpack.c.l.b16 %v159
    %v360 = vunpack.c.l.b16 %v160
    %v361 = vunpack.c.l.b16 %v161
    %v362 = vunpack.c.l.b16 %v162
    %v363 = vunpack.c.l.b16 %v163
    %v364 = vunpack.c.l.b16 %v164
    %v365 = vunpack.c.l.b16 %v165
    %v366 = vunpack.c.l.b16 %v166
    %v367 = vunpack.c.l.b16 %v167
    %v368 = vunpack.c.l.b16 %v168
    %v369 = vunpack.c.l.b16 %v169
    %v370 = vunpack.c.l.b16 %v170
    %v371 = vunpack.c.l.b16 %v171
    %v372 = vunpack.c.l.b16 %v172
    %v373 = vunpack.c.l.b16 %v173
    %v374 = vunpack.c.l.b16 %v174
    %v375 = vunpack.c.l.b16 %v175
    %v376 = vunpack.c.l.b16 %v176
    %v377 = vunpack.c.l.b16 %v177
    %v378 = vunpack.c.l.b16 %v178
    %v379 = vunpack.c.l.b16 %v179
    %v380 = vunpack.c.l.b16 %v180
    %v381 = vunpack.c.l.b16 %v181
    %v382 = vunpack.c.l.b16 %v182
    %v383 = vunpack.c.l.b16 %v183
    %v384 = vunpack.c.l.b16 %v184
    %v385 = vunpack.c.l.b16 %v185
    %v386 = vunpack.c.l.b16 %v186
    %v387 = vunpack.c.l.b16 %v187
    %v388 = vpack.c.b16 %v291, %v290
    %v389 = vpack.c.b16 %v293, %v292
    %v390 = vpack.c.b16 %v295, %v294
    %v391 = vpack.c.b16 %v297, %v296
    %v392 = vpack.c.b16 %v299, %v298
    %v393 = vpack.c.b16 %v301, %v300
    %v394 = vpack.c.b16 %v303, %v302
    %v395 = vpack.c.b16 %v305, %v304
    %v396 = vpack.c.b16 %v307, %v306
    %v397 = vpack.c.b16 %v309, %v308
    %v398 = vpack.c.b16 %v311, %v310
    %v399 = vpack.c.b16 %v313, %v312
    %v400 = vpack.c.b16 %v315, %v314
    %v401 = vpack.c.b16 %v317, %v316
    %v402 = vpack.c.b16 %v319, %v318
    %v403 = vpack.c.b16 %v321, %v320
    %v404 = vpack.c.b16 %v323, %v322
    %v405 = vpack.c.b16 %v325, %v324
    %v406 = vpack.c.b16 %v327, %v326
    %v407 = vpack.c.b16 %v329, %v328
    %v408 = vpack.c.b16 %v331, %v330
    %v409 = vpack.c.b16 %v333, %v332
    %v410 = vpack.c.b16 %v335, %v334
    %v411 = vpack.c.b16 %v337, %v336
    %v412 = vpack.c.b16 %v339, %v338
    %v413 = vpack.c.b16 %v341, %v340
    %v414 = vpack.c.b16 %v343, %v342
    %v415 = vpack.c.b16 %v345, %v344
    %v416 = vpack.c.b16 %v347, %v346
    %v417 = vpack.c.b16 %v349, %v348
    %v418 = vpack.c.b16 %v351, %v350
    %v419 = vpack.c.b16 %v353, %v352
    %v420 = vpack.c.b16 %v355, %v354
    %v421 = vpack.c.b16 %v357, %v356
    %v422 = vpack.c.b16 %v359, %v358
    %v423 = vpack.c.b16 %v361, %v360
    %v424 = vpack.c.b16 %v363, %v362
    %v425 = vpack.c.b16 %v365, %v364
    %v426 = vpack.c.b16 %v367, %v366
    %v427 = vpack.c.b16 %v369, %v368
    %v428 = vpack.c.b16 %v371, %v370
    %v429 = vpack.c.b16 %v373, %v372
    %v430 = vpack.c.b16 %v375, %v374
    %v431 = vpack.c.b16 %v377, %v376
    %v432 = vpack.c.b16 %v379, %v378
    %v433 = vpack.c.b16 %v381, %v380
    %v434 = vpack.c.b16 %v383, %v382
    %v435 = vpack.c.b16 %v385, %v384
    %v436 = vpack.c.b16 %v387, %v386
    %vm486 = vcmask 130048
    %v488 = vsel %vm486, %v89, 0
    %490 = vmatpush.bf16.msra.mxu0 %v395
    %491 = vmatpush.bf16.msra.mxu0 %v394
    %492 = vmatpush.bf16.msra.mxu0 %v393
    %493 = vmatpush.bf16.msra.mxu0 %v392
    %494 = vmatpush.bf16.msra.mxu0 %v391
    %495 = vmatpush.bf16.msra.mxu0 %v390
    %496 = vmatpush.bf16.msra.mxu0 %v389
    %497 = vmatpush.bf16.msra.mxu0 %v388
    %498 = vmatmul.bf16.gmra.mxu0 %v83
    %v499 = vpop.f32.mrf.mxu0
    %v500 = vadd.f32 %v190, %v499
    %v501 = vpop.f32.mrf.mxu0
    %502 = vdwg.mxu0
    %503 = vmatpush.bf16.msra.mxu0 %v403
    %504 = vmatpush.bf16.msra.mxu0 %v402
    %505 = vmatpush.bf16.msra.mxu0 %v401
    %506 = vmatpush.bf16.msra.mxu0 %v400
    %507 = vmatpush.bf16.msra.mxu0 %v399
    %508 = vmatpush.bf16.msra.mxu0 %v398
    %509 = vmatpush.bf16.msra.mxu0 %v397
    %510 = vmatpush.bf16.msra.mxu0 %v396
    %511 = vmatmul.bf16.gmra.mxu0 %v84
    %v512 = vpop.f32.mrf.mxu0
    %v513 = vadd.f32 %v500, %v512
    %v514 = vpop.f32.mrf.mxu0
    %515 = vdwg.mxu0
    %516 = vmatpush.bf16.msra.mxu0 %v411
    %517 = vmatpush.bf16.msra.mxu0 %v410
    %518 = vmatpush.bf16.msra.mxu0 %v409
    %519 = vmatpush.bf16.msra.mxu0 %v408
    %520 = vmatpush.bf16.msra.mxu0 %v407
    %521 = vmatpush.bf16.msra.mxu0 %v406
    %522 = vmatpush.bf16.msra.mxu0 %v405
    %523 = vmatpush.bf16.msra.mxu0 %v404
    %524 = vmatmul.bf16.gmra.mxu0 %v85
    %v525 = vpop.f32.mrf.mxu0
    %v526 = vadd.f32 %v513, %v525
    %v527 = vpop.f32.mrf.mxu0
    %528 = vdwg.mxu0
    %529 = vmatpush.bf16.msra.mxu0 %v419
    %530 = vmatpush.bf16.msra.mxu0 %v418
    %531 = vmatpush.bf16.msra.mxu0 %v417
    %532 = vmatpush.bf16.msra.mxu0 %v416
    %533 = vmatpush.bf16.msra.mxu0 %v415
    %534 = vmatpush.bf16.msra.mxu0 %v414
    %535 = vmatpush.bf16.msra.mxu0 %v413
    %536 = vmatpush.bf16.msra.mxu0 %v412
    %537 = vmatmul.bf16.gmra.mxu0 %v86
    %v538 = vpop.f32.mrf.mxu0
    %v539 = vadd.f32 %v526, %v538
    %v540 = vpop.f32.mrf.mxu0
    %541 = vdwg.mxu0
    %542 = vmatpush.bf16.msra.mxu0 %v427
    %543 = vmatpush.bf16.msra.mxu0 %v426
    %544 = vmatpush.bf16.msra.mxu0 %v425
    %545 = vmatpush.bf16.msra.mxu0 %v424
    %546 = vmatpush.bf16.msra.mxu0 %v423
    %547 = vmatpush.bf16.msra.mxu0 %v422
    %548 = vmatpush.bf16.msra.mxu0 %v421
    %549 = vmatpush.bf16.msra.mxu0 %v420
    %550 = vmatmul.bf16.gmra.mxu0 %v87
    %v551 = vpop.f32.mrf.mxu0
    %v552 = vadd.f32 %v539, %v551
    %v553 = vpop.f32.mrf.mxu0
    %554 = vdwg.mxu0
    %555 = vmatpush.bf16.msra.mxu0 %v435
    %556 = vmatpush.bf16.msra.mxu0 %v434
    %557 = vmatpush.bf16.msra.mxu0 %v433
    %558 = vmatpush.bf16.msra.mxu0 %v432
    %559 = vmatpush.bf16.msra.mxu0 %v431
    %560 = vmatpush.bf16.msra.mxu0 %v430
    %561 = vmatpush.bf16.msra.mxu0 %v429
    %562 = vmatpush.bf16.msra.mxu0 %v428
    %563 = vmatmul.bf16.gmra.mxu0 %v88
    %v564 = vpop.f32.mrf.mxu0
    %v565 = vadd.f32 %v552, %v564
    %v566 = vpop.f32.mrf.mxu0
    %567 = vdwg.mxu0
    %568 = vmatpush.bf16.msra.mxu0 0
    %569 = vmatpush.bf16.msra.mxu0 0
    %570 = vmatpush.bf16.msra.mxu0 0
    %571 = vmatpush.bf16.msra.mxu0 0
    %572 = vmatpush.bf16.msra.mxu0 0
    %573 = vmatpush.bf16.msra.mxu0 0
    %574 = vmatpush.bf16.msra.mxu0 0
    %575 = vmatpush.bf16.msra.mxu0 %v436
    %576 = vmatmul.bf16.gmra.mxu0 %v488
    %v577 = vpop.f32.mrf.mxu0
    %v578 = vadd.f32 %v565, %v577
    %v579 = vpop.f32.mrf.mxu0
    %580 = vdwg.mxu0
    %v581 = vmax.f32 %v578, 0.0
    %v582 = vpack.c.bf16 %v581, %v581
    %v583 = vld [vmem:[%s3] sm:$0xf]
    %v584 = vld [vmem:[%s3 + $0x4] sm:$0xf]
    %v585 = vld [vmem:[%s3 + $0x8] sm:$0xf]
    %v586 = vld [vmem:[%s3 + $0xc] sm:$0xf]
    %v587 = vld [vmem:[%s3 + $0x10] sm:$0xf]
    %v588 = vld [vmem:[%s3 + $0x14] sm:$0xf]
    %v589 = vld [vmem:[%s3 + $0x18] sm:$0xf]
    %v590 = vld [vmem:[%s3 + $0x1c] sm:$0xf]
    %v591 = vld [vmem:[%s3 + $0x20] sm:$0xf]
    %v592 = vld [vmem:[%s3 + $0x24] sm:$0xf]
    %v593 = vld [vmem:[%s3 + $0x28] sm:$0xf]
    %v594 = vld [vmem:[%s3 + $0x2c] sm:$0xf]
    %v595 = vld [vmem:[%s3 + $0x30] sm:$0xf]
    %v596 = vld [vmem:[%s3 + $0x34] sm:$0xf]
    %v597 = vld [vmem:[%s3 + $0x38] sm:$0xf]
    %v598 = vld [vmem:[%s3 + $0x3c] sm:$0xf]
    %v599 = vld [vmem:[%s4] sm:$0x1]
    %v601 = vperm.slane %v599, 0
    %v619 = vunpack.c.l.b16 %v583
    %v620 = vunpack.c.l.b16 %v584
    %v621 = vunpack.c.l.b16 %v585
    %v622 = vunpack.c.l.b16 %v586
    %v623 = vunpack.c.l.b16 %v587
    %v624 = vunpack.c.l.b16 %v588
    %v625 = vunpack.c.l.b16 %v589
    %v626 = vunpack.c.l.b16 %v590
    %v627 = vunpack.c.l.b16 %v591
    %v628 = vunpack.c.l.b16 %v592
    %v629 = vunpack.c.l.b16 %v593
    %v630 = vunpack.c.l.b16 %v594
    %v631 = vunpack.c.l.b16 %v595
    %v632 = vunpack.c.l.b16 %v596
    %v633 = vunpack.c.l.b16 %v597
    %v634 = vunpack.c.l.b16 %v598
    %v635 = vpack.c.b16 %v620, %v619
    %v636 = vpack.c.b16 %v622, %v621
    %v637 = vpack.c.b16 %v624, %v623
    %v638 = vpack.c.b16 %v626, %v625
    %v639 = vpack.c.b16 %v628, %v627
    %v640 = vpack.c.b16 %v630, %v629
    %v641 = vpack.c.b16 %v632, %v631
    %v642 = vpack.c.b16 %v634, %v633
    %651 = vmatpush.bf16.msra.mxu0 %v642
    %652 = vmatpush.bf16.msra.mxu0 %v641
    %653 = vmatpush.bf16.msra.mxu0 %v640
    %654 = vmatpush.bf16.msra.mxu0 %v639
    %655 = vmatpush.bf16.msra.mxu0 %v638
    %656 = vmatpush.bf16.msra.mxu0 %v637
    %657 = vmatpush.bf16.msra.mxu0 %v636
    %658 = vmatpush.bf16.msra.mxu0 %v635
    %659 = vmatmul.bf16.gmra.mxu0 %v582
    %v660 = vpop.f32.mrf.mxu0
    %v661 = vadd.f32 %v601, %v660
    %v662 = vpop.f32.mrf.mxu0
    %663 = vdwg.mxu0
    %664 = vst [vmem:[#allocation5] sm:$0xff] %v661
    // Predicated region
    $region26: #{simple_model_forward.1} parent=1 // pred_check
      _
    $region27: #{simple_model_forward.1} parent=1 // pred_check_branch
      %666 = sbr.rel (0) target = $region29
    $region28: #{simple_model_forward.1} parent=1 // pred_region
      %668 = vsyncadd [#allocation4], 96
      %s669 = sshll.u32 [#allocation5], 4
      %s670 = int_to_ptr.vmem [resolvable:$true] %s669
      %s671 = sshll.u32 %s5, 4
      %s672 = int_to_ptr.hbm [resolvable:$true] %s671
      %677 = dma.vmem_to_hbm [thread:$0]  %s670, 32, %s672, [#allocation4], 32, 32, 2
    $region29: #{simple_model_forward.1} parent=1 // pred_fallthru
      _
    // Predicated region
    $region30: #{simple_model_forward.1} parent=1 // pred_check
      _
    $region31: #{simple_model_forward.1} parent=1 // pred_check_branch
      %679 = sbr.rel (0) target = $region33
    $region32: #{simple_model_forward.1} parent=1 // pred_region
      %681 = dma.done [#allocation4], 128
    $region33: #{simple_model_forward.1} parent=1 // pred_fallthru
      _
    %682 = vsyncpa [#allocation3], 1
    %683 = vsyncpa [#allocation4], 1

</llo_original>
